<compile_context>
chip_gen: v7x
topology: tpu7x:2x2x1
jax: 0.10.0
libtpu: 0.0.40
codegen_flags: <defaults>
</compile_context>

<pallas_src>
import functools
import math

import jax
import jax.numpy as jnp
from jax.experimental import pallas as pl
from jax.experimental.pallas import tpu as pltpu

D_MODEL = 96

_TARGET_BLOCK_BYTES = 4 << 20   # ~4 MiB moved per x/out block (amortizes ~0.35us/step)
_VMEM_LIMIT_BYTES = 32 << 20    # raises v5e's 16 MiB scoped default; fits v7x's 64 MiB
_SPLIT_MIN_BYTES = 1 << 20      # only force a 2-step grid when there's real work


def make_pos_encoding(length: int) -> jnp.ndarray:
    """(d_model, length) positional encoding, matching the PyTorch __init__ exactly."""
    i = jnp.arange(D_MODEL, dtype=jnp.float32)
    even = (jnp.arange(D_MODEL) % 2) == 0
    freqs = jnp.where(
        even,
        10000.0 ** (-i / D_MODEL),
        -(10000.0 ** ((1.0 - i) / D_MODEL)),
    )[:, None]                                              # (d_model, 1)
    phases = jnp.where(even, 0.0, math.pi / 2.0)[:, None]   # (d_model, 1)
    pos = jnp.broadcast_to(
        jnp.arange(length, dtype=jnp.float32)[None, :], (D_MODEL, length)
    )
    return jnp.sin(pos * freqs + phases)                    # (d_model, length)


def _pos_encoder_kernel(x_ref, pe_ref, o_ref):
    # x_ref: (TB, TL), pe_ref: (1, TL) -> VPU broadcast add over batch rows.
    o_ref[...] = x_ref[...] + pe_ref[...]


def _pick_tiles(B: int, N: int, itemsize: int):
    # Sublane multiple is dtype-aware: 8 for f32, 16 for bf16, 32 for int8/fp8.
    sub = max(8, 32 // itemsize)
    min_rows = B if B <= sub else sub

    if min_rows * N * itemsize <= _TARGET_BLOCK_BYTES:
        # Preferred: full-row tiles. One fully contiguous HBM transfer per block,
        # and the pe row is fetched from HBM exactly once for the whole kernel.
        tl = N
        if B <= sub:
            tb = B
        else:
            tb = min(B, _TARGET_BLOCK_BYTES // (tl * itemsize))
            tb = max(sub, tb - tb % sub)
    else:
        # A sublane-minimum row slab already blows the block budget: chunk lanes
        # in 128-multiples instead (ragged tails are masked by Pallas).
        tl = max(128, (_TARGET_BLOCK_BYTES // (min_rows * itemsize)) // 128 * 128)
        tl = min(tl, N)
        tb = min_rows

    # v7x megacore nudge: avoid a (1, 1) grid when there is enough work to split.
    if (pl.cdiv(N, tl) == 1 and pl.cdiv(B, tb) == 1
            and B * N * itemsize >= _SPLIT_MIN_BYTES):
        if tb >= 2 * sub:
            half = -(-tb // 2)                 # ceil(tb / 2)
            tb = -(-half // sub) * sub         # round up to sublane multiple
        elif tl >= 256:
            half = -(-tl // 2)                 # ceil(tl / 2)
            tl = -(-half // 128) * 128         # round up to lane multiple
    return tb, tl


@functools.partial(jax.jit, donate_argnums=(0,))
def pos_encoder(x: jnp.ndarray, pos_encoding: jnp.ndarray) -> jnp.ndarray:
    """x: (B, d_model, length); pos_encoding: (d_model, length). x is donated."""
    B, C, L = x.shape
    assert pos_encoding.shape == (C, L)
    N = C * L

    # Lane-dense 2-D views of the same data (no copy: last axis stays minor).
    # NOTE: N = 96 * L is a multiple of 128 whenever L % 4 == 0; odd L only costs a
    # masked tail vreg per row, padding here would break the in-place alias.
    x2 = x.reshape(B, N)
    pe2 = pos_encoding.reshape(1, N).astype(x.dtype)

    itemsize = jnp.dtype(x.dtype).itemsize
    tb, tl = _pick_tiles(B, N, itemsize)
    grid = (pl.cdiv(N, tl), pl.cdiv(B, tb))   # lane tiles outer, batch innermost

    grid_spec = pltpu.PrefetchScalarGridSpec(
        num_scalar_prefetch=0,
        grid=grid,
        in_specs=[
            pl.BlockSpec((tb, tl), lambda c, r: (r, c)),   # x tile
            pl.BlockSpec((1, tl), lambda c, r: (0, c)),    # pe tile, resident across r
        ],
        out_specs=pl.BlockSpec((tb, tl), lambda c, r: (r, c)),
    )

    out2 = pl.pallas_call(
        _pos_encoder_kernel,
        out_shape=jax.ShapeDtypeStruct((B, N), x.dtype),
        grid_spec=grid_spec,
        input_output_aliases={0: 0},   # in-place add on the (donated) x buffer
        compiler_params=pltpu.CompilerParams(
            dimension_semantics=("parallel", "parallel"),
            vmem_limit_bytes=_VMEM_LIMIT_BYTES,
        ),
        cost_estimate=pl.CostEstimate(
            flops=B * N,
            transcendentals=0,
            bytes_accessed=itemsize * (2 * B * N + N),
        ),
    )(x2, pe2)

    return out2.reshape(B, C, L)


if __name__ == "__main__":
    key = jax.random.PRNGKey(0)
    B, L = 2, 16
    x = jax.random.normal(key, (B, D_MODEL, L), dtype=jnp.float32)
    pe = make_pos_encoding(L)

    # Plain-JAX reference of the forward pass; materialize it BEFORE x is donated.
    ref = jax.block_until_ready(x + pe[None, :, :])

    out = pos_encoder(x, pe)            # x's buffer is donated / aliased in place
    out = jax.block_until_ready(out)

    assert out.shape == (B, D_MODEL, L)
    assert jnp.allclose(out, ref, atol=1e-6), "mismatch vs reference"
    print("KERNEL_OK")
</pallas_src>

<mosaic_0001>
module attributes {stable_mosaic.version = 11 : i64} {
  func.func @_pos_encoder_kernel(%arg0: i32, %arg1: i32, %arg2: memref<2x1536xf32, #tpu.memory_space<vmem>>, %arg3: memref<1x1536xf32, #tpu.memory_space<vmem>>, %arg4: memref<2x1536xf32, #tpu.memory_space<vmem>>) attributes {dimension_semantics = [#tpu.dimension_semantics<parallel>, #tpu.dimension_semantics<parallel>], iteration_bounds = array<i64: 1, 1>, scalar_prefetch = 0 : i64, scratch_operands = 0 : i64, tpu.core_type = #tpu.core_type<tc>, window_params = [{transform_indices = @transform_0, window_bounds = array<i64: 2, 1536>}, {transform_indices = @transform_1, window_bounds = array<i64: 1, 1536>}, {transform_indices = @transform_2, window_bounds = array<i64: 2, 1536>}]} {
    %c0 = arith.constant 0 : index
    %c0_0 = arith.constant 0 : index
    %0 = vector.load %arg2[%c0, %c0_0] : memref<2x1536xf32, #tpu.memory_space<vmem>>, vector<2x1536xf32>
    %c0_1 = arith.constant 0 : index
    %c0_2 = arith.constant 0 : index
    %1 = vector.load %arg3[%c0_1, %c0_2] : memref<1x1536xf32, #tpu.memory_space<vmem>>, vector<1x1536xf32>
    %2 = vector.broadcast %1 : vector<1x1536xf32> to vector<2x1536xf32>
    %3 = arith.addf %0, %2 : vector<2x1536xf32>
    %c0_3 = arith.constant 0 : index
    %c0_4 = arith.constant 0 : index
    %4 = vector.load %arg4[%c0_3, %c0_4] : memref<2x1536xf32, #tpu.memory_space<vmem>>, vector<2x1536xf32>
    tpu.vector_store %arg4[%c0_3, %c0_4], %3 {strides = array<i32>} : memref<2x1536xf32, #tpu.memory_space<vmem>>, vector<2x1536xf32>,
    return
  }
  func.func @transform_0(%arg0: i32, %arg1: i32) -> (i32, i32) {
    %c0_i32 = arith.constant 0 : i32
    return %arg1, %arg0 : i32, i32
  }
  func.func @transform_1(%arg0: i32, %arg1: i32) -> (i32, i32) {
    %c0_i32 = arith.constant 0 : i32
    %c0_i32_0 = arith.constant 0 : i32
    return %c0_i32, %arg0 : i32, i32
  }
  func.func @transform_2(%arg0: i32, %arg1: i32) -> (i32, i32) {
    %c0_i32 = arith.constant 0 : i32
    return %arg1, %arg0 : i32, i32
  }
}

</mosaic_0001>

<llo_original>
// kernel: pos_encoder.1
$region0: #{pos_encoder.1}
  #allocation0 [shape = 'u32[]', space=smem, size = 0x4, offset = 0x4, fixed_abs, tag = 'smem constant byte address 0x4 - core index']
  #allocation1 [shape = 'u32[144,128]{1,0:T(1,128)}', space=vmem, size = 0x12000, scoped, tag = 'internal scratch']
  %s0 = inlined_call_operand.vmem [shape: f32[2,1536], index: 0, kind: input, shape index: {}, may-alias: {0,2}]
  %s1 = inlined_call_operand.vmem [shape: f32[1,1536], index: 1, kind: input, shape index: {}]
  %s2 = inlined_call_operand.vmem [shape: f32[2,1536], index: 2, kind: output, shape index: {}, may-alias: {0,2}]
  %s3 = sld [smem:[#allocation0]]
  $region18: #{pos_encoder.1} parent=0
    _
  %s5 = ssub.s32 1, %s3
  %s6 = scalar_select 0, %s5, %s3
  // Predicated region
  $region2: #{pos_encoder.1} parent=0 // pred_check
    _
  $region3: #{pos_encoder.1} parent=0 // pred_check_branch
    %8 = sbr.rel (0) target = $region5
  $region4: #{pos_encoder.1} parent=0 // pred_region
    _
  $region5: #{pos_encoder.1} parent=0 // pred_fallthru
    _
  // Predicated region
  $region6: #{pos_encoder.1} parent=0 // pred_check
    _
  $region7: #{pos_encoder.1} parent=0 // pred_check_branch
    %10 = sbr.rel (0) target = $region9
  $region8: #{pos_encoder.1} parent=0 // pred_region
    _
  $region9: #{pos_encoder.1} parent=0 // pred_fallthru
    _
  %v11 = vld [vmem:[%s0] sm:$0xff]
  %v12 = vld [vmem:[%s0 + $0x8] sm:$0xff]
  %v13 = vld [vmem:[%s0 + $0x10] sm:$0xff]
  %v14 = vld [vmem:[%s1] sm:$0xff]
  %v15 = vld [vmem:[%s1 + $0x8] sm:$0xf]
  %v18 = vlaneseq
  %v19 = vshrl.u32 %v18, 7
  %v20 = vsub.s32 0, %v19
  %v21 = vrot.slane %v14, %v20
  %v22 = vlaneseq
  %v23 = vshrl.u32 %v22, 7
  %v24 = vsub.s32 1, %v23
  %v25 = vrot.slane %v14, %v24
  %v26 = vlaneseq
  %v27 = vshrl.u32 %v26, 7
  %v28 = vsub.s32 2, %v27
  %v29 = vrot.slane %v14, %v28
  %v30 = vlaneseq
  %v31 = vshrl.u32 %v30, 7
  %v32 = vsub.s32 3, %v31
  %v33 = vrot.slane %v14, %v32
  %v34 = vlaneseq
  %v35 = vshrl.u32 %v34, 7
  %v36 = vsub.s32 4, %v35
  %v37 = vrot.slane %v14, %v36
  %v38 = vlaneseq
  %v39 = vshrl.u32 %v38, 7
  %v40 = vsub.s32 5, %v39
  %v41 = vrot.slane %v14, %v40
  %v42 = vlaneseq
  %v43 = vshrl.u32 %v42, 7
  %v44 = vsub.s32 6, %v43
  %v45 = vrot.slane %v14, %v44
  %v46 = vlaneseq
  %v47 = vshrl.u32 %v46, 7
  %v48 = vsub.s32 7, %v47
  %v49 = vrot.slane %v14, %v48
  %v50 = vlaneseq
  %v51 = vshrl.u32 %v50, 7
  %v52 = vsub.s32 0, %v51
  %v53 = vrot.slane %v15, %v52
  %v54 = vlaneseq
  %v55 = vshrl.u32 %v54, 7
  %v56 = vsub.s32 1, %v55
  %v57 = vrot.slane %v15, %v56
  %v58 = vlaneseq
  %v59 = vshrl.u32 %v58, 7
  %v60 = vsub.s32 2, %v59
  %v61 = vrot.slane %v15, %v60
  %v62 = vlaneseq
  %v63 = vshrl.u32 %v62, 7
  %v64 = vsub.s32 3, %v63
  %v65 = vrot.slane %v15, %v64
  %v66 = vcombine.low %v21, %v25
  %v67 = vcombine.low %v29, %v33
  %v69 = vunpack.c.l.s4 1983009808
  %v70 = vunpack.c.0.s8 %v69
  %v71 = vlaneseq
  %v72 = vshrl.u32 %v71, 7
  %v73 = vsub.s32 %v70, %v72
  %v74 = vrot.slane %v66, %v73
  %v76 = vunpack.c.l.s4 1983009808
  %v77 = vunpack.c.0.s8 %v76
  %v78 = vlaneseq
  %v79 = vshrl.u32 %v78, 7
  %v80 = vsub.s32 %v77, %v79
  %v81 = vrot.slane %v67, %v80
  %v82 = vcombine.low %v74, %v81
  %v83 = vcombine.low %v37, %v41
  %v84 = vcombine.low %v45, %v49
  %v86 = vunpack.c.l.s4 1983009808
  %v87 = vunpack.c.0.s8 %v86
  %v88 = vlaneseq
  %v89 = vshrl.u32 %v88, 7
  %v90 = vsub.s32 %v87, %v89
  %v91 = vrot.slane %v83, %v90
  %v93 = vunpack.c.l.s4 1983009808
  %v94 = vunpack.c.0.s8 %v93
  %v95 = vlaneseq
  %v96 = vshrl.u32 %v95, 7
  %v97 = vsub.s32 %v94, %v96
  %v98 = vrot.slane %v84, %v97
  %v99 = vcombine.low %v91, %v98
  %v100 = vcombine.low %v53, %v57
  %v101 = vcombine.low %v61, %v65
  %v103 = vunpack.c.l.s4 1983009808
  %v104 = vunpack.c.0.s8 %v103
  %v105 = vlaneseq
  %v106 = vshrl.u32 %v105, 7
  %v107 = vsub.s32 %v104, %v106
  %v108 = vrot.slane %v100, %v107
  %v110 = vunpack.c.l.s4 1983009808
  %v111 = vunpack.c.0.s8 %v110
  %v112 = vlaneseq
  %v113 = vshrl.u32 %v112, 7
  %v114 = vsub.s32 %v111, %v113
  %v115 = vrot.slane %v101, %v114
  %v116 = vcombine.low %v108, %v115
  %v120 = vadd.f32 %v11, %v82
  %v121 = vadd.f32 %v12, %v99
  %v122 = vadd.f32 %v13, %v116
  %123 = vst [vmem:[%s2] sm:$0xff] %v120
  %124 = vst [vmem:[%s2 + $0x8] sm:$0xff] %v121
  %125 = vst [vmem:[%s2 + $0x10] sm:$0xff] %v122
  // Predicated region
  $region10: #{pos_encoder.1} parent=0 // pred_check
    _
  $region11: #{pos_encoder.1} parent=0 // pred_check_branch
    %127 = sbr.rel (0) target = $region13
  $region12: #{pos_encoder.1} parent=0 // pred_region
    _
  $region13: #{pos_encoder.1} parent=0 // pred_fallthru
    _
  // Predicated region
  $region14: #{pos_encoder.1} parent=0 // pred_check
    _
  $region15: #{pos_encoder.1} parent=0 // pred_check_branch
    %129 = sbr.rel (0) target = $region17
  $region16: #{pos_encoder.1} parent=0 // pred_region
    _
  $region17: #{pos_encoder.1} parent=0 // pred_fallthru
    _

</llo_original>
